<compile_context>
chip_gen: v6e
topology: v6e:2x2x1
jax: 0.10.0
libtpu: 0.0.40
codegen_flags: <defaults>
</compile_context>

<pallas_src>
import functools
import math

import jax
import jax.numpy as jnp
from jax.experimental import pallas as pl
from jax.experimental.pallas import tpu as pltpu

_SUB = 8                 # sublanes per vreg tile
_LANE = 128              # lanes per vreg tile
_BLOCK_ROWS_MAX = 4096   # (4096, 128) f32 = 2 MiB per input per block


def _round_up(v, m):
    return ((v + m - 1) // m) * m


def _focal_kernel(x_ref, t_ref, o_ref, acc_ref, *, alpha, gamma,
                  block_rows, blocks_per_split, n_blocks, tail_valid_rows):
    i = pl.program_id(1)          # reduction ("arbitrary") axis

    @pl.when(i == 0)
    def _():
        acc_ref[...] = jnp.zeros_like(acc_ref)

    def elem_loss(x, t):
        # Stable BCE-with-logits via z = (2t-1)*x (bitwise identical to
        # max(x,0)-x*t+log1p(exp(-|x|)) for binary t; soft targets contribute
        # 0 anyway because at==0 for them, matching the PyTorch module).
        z = (2.0 * t - 1.0) * x
        e = jnp.exp(-jnp.abs(z))                     # single exp per element
        bce = jnp.maximum(-z, 0.0) + jnp.log1p(e)
        inv = 1.0 / (1.0 + e)                        # exact reciprocal
        one_m_pt = jnp.where(z >= 0.0, e, 1.0) * inv  # == 1 - exp(-bce)

        gi = int(gamma)
        if float(gi) == float(gamma) and 0 <= gi <= 8:
            # Small integer gamma (incl. default 2.0): repeated multiplies.
            if gi == 0:
                w = jnp.ones_like(one_m_pt)
            else:
                w = one_m_pt
                for _ in range(gi - 1):
                    w = w * one_m_pt
        else:
            w = jnp.power(one_m_pt, jnp.float32(gamma))

        # Exact replica of the PyTorch masked assignment (soft targets -> 0).
        at = jnp.where(t == 1.0, jnp.float32(alpha), jnp.float32(0.0))
        at = jnp.where(t == 0.0, jnp.float32(1.0 - alpha), at)
        return at * w * bce

    def accumulate(x, t):
        f = elem_loss(x, t)
        # Per-step sublane-group reduce -> tiny (8,128) accumulator RMW.
        acc_ref[...] += jnp.sum(
            f.reshape(block_rows // _SUB, _SUB, _LANE), axis=0)

    x = x_ref[...].astype(jnp.float32)
    t = t_ref[...].astype(jnp.float32)

    if tail_valid_rows is None:
        # Grid exactly covers the array: every block is fully valid.
        accumulate(x, t)
    else:
        blk = pl.program_id(0) * blocks_per_split + i
        is_tail = blk == (n_blocks - 1)

        @pl.when(jnp.logical_not(is_tail))
        def _():
            accumulate(x, t)

        @pl.when(is_tail)
        def _():
            # Rows past the end of the array hold undefined VMEM data; force
            # them to the (x=0, t=0) "pad element" whose exact contribution
            # the wrapper subtracts in closed form.
            ridx = jax.lax.broadcasted_iota(jnp.int32, (block_rows, _LANE), 0)
            valid = ridx < tail_valid_rows
            accumulate(jnp.where(valid, x, 0.0), jnp.where(valid, t, 0.0))

    @pl.when(i == pl.num_programs(1) - 1)
    def _():
        o_ref[...] = acc_ref[...]


def focal_loss(logits, target, alpha=0.25, gamma=2.0):
    """Pallas TPU focal loss.  Returns a scalar float32 (mean over elems)."""
    assert logits.shape == target.shape
    n = int(logits.size)
    assert n > 0

    x = logits.reshape(-1)
    t = target.reshape(-1)

    # Lane-dense (rows, 128) view.  Pads (only when needed) are exact zeros;
    # their contribution is removed in closed form after the kernel.
    lane_rem = n % _LANE
    if lane_rem:
        x = jnp.pad(x, (0, _LANE - lane_rem))
        t = jnp.pad(t, (0, _LANE - lane_rem))
    rows = x.shape[0] // _LANE
    x = x.reshape(rows, _LANE)
    t = t.reshape(rows, _LANE)

    if rows % _SUB:
        new_rows = _round_up(rows, _SUB)
        x = jnp.pad(x, ((0, new_rows - rows), (0, 0)))
        t = jnp.pad(t, ((0, new_rows - rows), (0, 0)))
        rows = new_rows

    block_rows = min(rows, _BLOCK_ROWS_MAX)
    n_blocks = -(-rows // block_rows)

    # 2-way leading "parallel" split (both TCs on v7x) only when it divides
    # the block count exactly -> no duplicated / wasted block reads ever.
    n_splits = 2 if (n_blocks >= 2 and n_blocks % 2 == 0) else 1
    blocks_per_split = n_blocks // n_splits

    # Rows of the last block that lie past the array end (undefined in VMEM).
    covered_rows = n_blocks * block_rows
    tail_valid_rows = None
    if covered_rows != rows:
        tail_valid_rows = rows - (n_blocks - 1) * block_rows

    kernel = functools.partial(
        _focal_kernel, alpha=float(alpha), gamma=float(gamma),
        block_rows=block_rows, blocks_per_split=blocks_per_split,
        n_blocks=n_blocks, tail_valid_rows=tail_valid_rows)

    def in_map(c, i):
        return (c * blocks_per_split + i, 0)

    partials = pl.pallas_call(
        kernel,
        out_shape=jax.ShapeDtypeStruct((n_splits * _SUB, _LANE), jnp.float32),
        grid_spec=pltpu.PrefetchScalarGridSpec(
            num_scalar_prefetch=0,
            grid=(n_splits, blocks_per_split),
            in_specs=[
                pl.BlockSpec((block_rows, _LANE), in_map),
                pl.BlockSpec((block_rows, _LANE), in_map),
            ],
            out_specs=pl.BlockSpec((_SUB, _LANE), lambda c, i: (c, 0)),
            scratch_shapes=[pltpu.VMEM((_SUB, _LANE), jnp.float32)],
        ),
        compiler_params=pltpu.CompilerParams(
            dimension_semantics=("parallel", "arbitrary"),
            vmem_limit_bytes=32 * 1024 * 1024,
        ),
        cost_estimate=pl.CostEstimate(
            flops=20 * n, transcendentals=2 * n, bytes_accessed=8 * n),
    )(x, t)

    # Every pad element (wrapper zero-pads + sanitized tail overhang) is
    # exactly (x=0, t=0) and contributes (1-alpha) * 0.5**gamma * ln(2).
    total = jnp.sum(partials)
    pad_elems = covered_rows * _LANE - n
    if pad_elems:
        pad_const = (1.0 - float(alpha)) * (0.5 ** float(gamma)) * math.log(2.0)
        total = total - jnp.float32(pad_elems * pad_const)
    return total * (1.0 / float(n))


def _reference_focal_loss(logits, target, alpha=0.25, gamma=2.0):
    """Plain-JAX reference for validation."""
    x = logits.astype(jnp.float32)
    t = target.astype(jnp.float32)
    bce = jnp.maximum(x, 0.0) - x * t + jnp.log1p(jnp.exp(-jnp.abs(x)))
    at = (t == 1.0).astype(jnp.float32) * alpha
    at = jnp.where(t == 0.0, 1.0 - alpha, at)
    pt = jnp.exp(-bce)
    return jnp.mean(at * (1.0 - pt) ** gamma * bce)


if __name__ == "__main__":
    key = jax.random.PRNGKey(0)
    k1, k2, k3, k4 = jax.random.split(key, 4)

    # Main case: NCHW-like, batch=2, channels=4, spatial=16x16.
    shape = (2, 4, 16, 16)
    logits = jax.random.normal(k1, shape, dtype=jnp.float32)
    target = (jax.random.uniform(k2, shape) > 0.5).astype(jnp.float32)

    loss = jax.block_until_ready(focal_loss(logits, target, alpha=0.25, gamma=2.0))
    ref = _reference_focal_loss(logits, target, alpha=0.25, gamma=2.0)
    assert jnp.allclose(loss, ref, atol=1e-6, rtol=1e-5), (loss, ref)

    # Odd-sized case: exercises the wrapper zero-pad + closed-form correction.
    shape2 = (3, 5, 7, 11)
    logits2 = jax.random.normal(k3, shape2, dtype=jnp.float32)
    target2 = (jax.random.uniform(k4, shape2) > 0.5).astype(jnp.float32)

    loss2 = jax.block_until_ready(focal_loss(logits2, target2, alpha=0.25, gamma=2.0))
    ref2 = _reference_focal_loss(logits2, target2, alpha=0.25, gamma=2.0)
    assert jnp.allclose(loss2, ref2, atol=1e-6, rtol=1e-5), (loss2, ref2)

    print("KERNEL_OK")
</pallas_src>

<mosaic_0001>
module attributes {stable_mosaic.version = 11 : i64} {
  func.func @_focal_kernel(%arg0: i32, %arg1: i32, %arg2: memref<16x128xf32, #tpu.memory_space<vmem>>, %arg3: memref<16x128xf32, #tpu.memory_space<vmem>>, %arg4: memref<8x128xf32, #tpu.memory_space<vmem>>, %arg5: memref<8x128xf32, #tpu.memory_space<vmem>>) attributes {dimension_semantics = [#tpu.dimension_semantics<parallel>, #tpu.dimension_semantics<arbitrary>], iteration_bounds = array<i64: 1, 1>, scalar_prefetch = 0 : i64, scratch_operands = 1 : i64, tpu.core_type = #tpu.core_type<tc>, window_params = [{transform_indices = @transform_0, window_bounds = array<i64: 16, 128>}, {transform_indices = @transform_1, window_bounds = array<i64: 16, 128>}, {transform_indices = @transform_2, window_bounds = array<i64: 8, 128>}]} {
    %c0_i32 = arith.constant 0 : i32
    %0 = arith.cmpi eq, %arg1, %c0_i32 : i32
    %1 = arith.extui %0 : i1 to i32
    %c0_i32_0 = arith.constant 0 : i32
    %2 = arith.cmpi ne, %1, %c0_i32_0 : i32
    scf.if %2 {
      %cst_24 = arith.constant 0.000000e+00 : f32
      %49 = vector.broadcast %cst_24 : f32 to vector<8x128xf32>
      %c0_25 = arith.constant 0 : index
      %c0_26 = arith.constant 0 : index
      %50 = vector.load %arg5[%c0_25, %c0_26] : memref<8x128xf32, #tpu.memory_space<vmem>>, vector<8x128xf32>
      tpu.vector_store %arg5[%c0_25, %c0_26], %49 {strides = array<i32>} : memref<8x128xf32, #tpu.memory_space<vmem>>, vector<8x128xf32>,
    } else {
    }
    %c0 = arith.constant 0 : index
    %c0_1 = arith.constant 0 : index
    %3 = vector.load %arg2[%c0, %c0_1] : memref<16x128xf32, #tpu.memory_space<vmem>>, vector<16x128xf32>
    %c0_2 = arith.constant 0 : index
    %c0_3 = arith.constant 0 : index
    %4 = vector.load %arg3[%c0_2, %c0_3] : memref<16x128xf32, #tpu.memory_space<vmem>>, vector<16x128xf32>
    %cst = arith.constant 2.000000e+00 : f32
    %5 = vector.broadcast %cst : f32 to vector<16x128xf32>
    %6 = arith.mulf %5, %4 : vector<16x128xf32>
    %cst_4 = arith.constant 1.000000e+00 : f32
    %7 = vector.broadcast %cst_4 : f32 to vector<16x128xf32>
    %8 = arith.subf %6, %7 : vector<16x128xf32>
    %9 = arith.mulf %8, %3 : vector<16x128xf32>
    %10 = math.absf %9 : vector<16x128xf32>
    %cst_5 = arith.constant 0.000000e+00 : f32
    %11 = vector.broadcast %cst_5 : f32 to vector<16x128xf32>
    %12 = arith.subf %11, %10 : vector<16x128xf32>
    %13 = math.exp %12 : vector<16x128xf32>
    %cst_6 = arith.constant 0.000000e+00 : f32
    %14 = vector.broadcast %cst_6 : f32 to vector<16x128xf32>
    %15 = arith.subf %14, %9 : vector<16x128xf32>
    %cst_7 = arith.constant 0.000000e+00 : f32
    %16 = vector.broadcast %cst_7 : f32 to vector<16x128xf32>
    %17 = arith.maximumf %15, %16 : vector<16x128xf32>
    %18 = math.log1p %13 : vector<16x128xf32>
    %19 = arith.addf %17, %18 : vector<16x128xf32>
    %cst_8 = arith.constant 1.000000e+00 : f32
    %20 = vector.broadcast %cst_8 : f32 to vector<16x128xf32>
    %21 = arith.addf %20, %13 : vector<16x128xf32>
    %cst_9 = arith.constant 1.000000e+00 : f32
    %22 = vector.broadcast %cst_9 : f32 to vector<16x128xf32>
    %23 = arith.divf %22, %21 : vector<16x128xf32>
    %cst_10 = arith.constant 0.000000e+00 : f32
    %24 = vector.broadcast %cst_10 : f32 to vector<16x128xf32>
    %25 = arith.cmpf oge, %9, %24 : vector<16x128xf32>
    %cst_11 = arith.constant 1.000000e+00 : f32
    %26 = vector.broadcast %cst_11 : f32 to vector<16x128xf32>
    %27 = arith.select %25, %13, %26 : vector<16x128xi1>, vector<16x128xf32>
    %28 = arith.mulf %27, %23 : vector<16x128xf32>
    %29 = arith.mulf %28, %28 : vector<16x128xf32>
    %cst_12 = arith.constant 1.000000e+00 : f32
    %30 = vector.broadcast %cst_12 : f32 to vector<16x128xf32>
    %31 = arith.cmpf oeq, %4, %30 : vector<16x128xf32>
    %cst_13 = arith.constant 2.500000e-01 : f32
    %cst_14 = arith.constant 0.000000e+00 : f32
    %32 = vector.broadcast %cst_13 : f32 to vector<16x128xf32>
    %33 = vector.broadcast %cst_14 : f32 to vector<16x128xf32>
    %34 = arith.select %31, %32, %33 : vector<16x128xi1>, vector<16x128xf32>
    %cst_15 = arith.constant 0.000000e+00 : f32
    %35 = vector.broadcast %cst_15 : f32 to vector<16x128xf32>
    %36 = arith.cmpf oeq, %4, %35 : vector<16x128xf32>
    %cst_16 = arith.constant 7.500000e-01 : f32
    %37 = vector.broadcast %cst_16 : f32 to vector<16x128xf32>
    %38 = arith.select %36, %37, %34 : vector<16x128xi1>, vector<16x128xf32>
    %39 = arith.mulf %38, %29 : vector<16x128xf32>
    %40 = arith.mulf %39, %19 : vector<16x128xf32>
    %c0_17 = arith.constant 0 : index
    %c0_18 = arith.constant 0 : index
    %41 = vector.load %arg5[%c0_17, %c0_18] : memref<8x128xf32, #tpu.memory_space<vmem>>, vector<8x128xf32>
    %42 = vector.shape_cast %40 : vector<16x128xf32> to vector<2x8x128xf32>
    %cst_19 = arith.constant dense<0.000000e+00> : vector<8x128xf32>
    %43 = vector.multi_reduction <add>, %42, %cst_19 [0] : vector<2x8x128xf32> to vector<8x128xf32>
    %44 = arith.addf %41, %43 : vector<8x128xf32>
    %c0_20 = arith.constant 0 : index
    %c0_21 = arith.constant 0 : index
    %45 = vector.load %arg5[%c0_20, %c0_21] : memref<8x128xf32, #tpu.memory_space<vmem>>, vector<8x128xf32>
    tpu.vector_store %arg5[%c0_20, %c0_21], %44 {strides = array<i32>} : memref<8x128xf32, #tpu.memory_space<vmem>>, vector<8x128xf32>,
    %c0_i32_22 = arith.constant 0 : i32
    %46 = arith.cmpi eq, %arg1, %c0_i32_22 : i32
    %47 = arith.extui %46 : i1 to i32
    %c0_i32_23 = arith.constant 0 : i32
    %48 = arith.cmpi ne, %47, %c0_i32_23 : i32
    scf.if %48 {
      %c0_24 = arith.constant 0 : index
      %c0_25 = arith.constant 0 : index
      %49 = vector.load %arg5[%c0_24, %c0_25] : memref<8x128xf32, #tpu.memory_space<vmem>>, vector<8x128xf32>
      %c0_26 = arith.constant 0 : index
      %c0_27 = arith.constant 0 : index
      %50 = vector.load %arg4[%c0_26, %c0_27] : memref<8x128xf32, #tpu.memory_space<vmem>>, vector<8x128xf32>
      tpu.vector_store %arg4[%c0_26, %c0_27], %49 {strides = array<i32>} : memref<8x128xf32, #tpu.memory_space<vmem>>, vector<8x128xf32>,
    } else {
    }
    return
  }
  func.func @transform_0(%arg0: i32, %arg1: i32) -> (i32, i32) {
    %c1_i32 = arith.constant 1 : i32
    %0 = arith.muli %arg0, %c1_i32 : i32
    %1 = arith.addi %0, %arg1 : i32
    %c0_i32 = arith.constant 0 : i32
    %c0_i32_0 = arith.constant 0 : i32
    return %1, %c0_i32 : i32, i32
  }
  func.func @transform_1(%arg0: i32, %arg1: i32) -> (i32, i32) {
    %c1_i32 = arith.constant 1 : i32
    %0 = arith.muli %arg0, %c1_i32 : i32
    %1 = arith.addi %0, %arg1 : i32
    %c0_i32 = arith.constant 0 : i32
    %c0_i32_0 = arith.constant 0 : i32
    return %1, %c0_i32 : i32, i32
  }
  func.func @transform_2(%arg0: i32, %arg1: i32) -> (i32, i32) {
    %c0_i32 = arith.constant 0 : i32
    %c0_i32_0 = arith.constant 0 : i32
    return %arg0, %c0_i32 : i32, i32
  }
}

</mosaic_0001>

<llo_original>
// kernel: tpu_custom_call.1
$region0: #{tpu_custom_call.1}
  #allocation0 [shape = 'u32[]', space=smem, size = 0x4, offset = 0x4, fixed_abs, tag = 'smem constant byte address 0x4 - core index']
  #allocation1 [shape = 'u32[144,128]{1,0:T(1,128)}', space=vmem, size = 0x12000, scoped, tag = 'internal scratch']
  #allocation2 [shape = 'f32[8,128]{1,0:T(8,128)}', space=vmem, size = 0x1000, scoped, tag = 'scratch operand']
  %s0 = inlined_call_operand.hbm [shape: f32[16,128], index: 0, kind: input, shape index: {}]
  %s1 = inlined_call_operand.hbm [shape: f32[16,128], index: 1, kind: input, shape index: {}]
  %s2 = inlined_call_operand.hbm [shape: f32[8,128], index: 2, kind: output, shape index: {}]
  %s3 = sld [smem:[#allocation0]]
  $region34: #{tpu_custom_call.1} parent=0
    _
  %s5 = ssub.s32 1, %s3
  %s6 = scalar_select 0, %s5, %s3
  $region1: #{tpu_custom_call.1} parent=0
    #allocation3 [shape = 'u8[8192]{0}', space=vmem, size = 0x2000, scoped, tag = 'input window, operand 0, single buffered']
    #allocation4 [shape = 's32[1]{0}', space=sflag, size = 0x4, scoped, tag = 'scoped memory for tpu_custom_call.1']
    #allocation5 [shape = 's32[1]{0}', space=sflag, size = 0x4, scoped, tag = 'scoped memory for tpu_custom_call.1']
    #allocation6 [shape = 'u8[8192]{0}', space=vmem, size = 0x2000, scoped, tag = 'input window, operand 1, single buffered']
    #allocation7 [shape = 's32[1]{0}', space=sflag, size = 0x4, scoped, tag = 'scoped memory for tpu_custom_call.1']
    #allocation8 [shape = 'u8[4096]{0}', space=vmem, size = 0x1000, scoped, tag = 'output window, operand 0, single buffered']
    %7 = vsyncpa [#allocation4], 0
    %8 = vsyncpa [#allocation7], 0
    %9 = vsyncpa [#allocation5], 0
    // Predicated region
    $region2: #{tpu_custom_call.1} parent=1 // pred_check
      _
    $region3: #{tpu_custom_call.1} parent=1 // pred_check_branch
      %11 = sbr.rel (0) target = $region5
    $region4: #{tpu_custom_call.1} parent=1 // pred_region
      %s12 = sadd.s32 0, 0
      %s13 = smul.u32 2, %s12
      %s15 = ssub.s32 256, 256
      %16 = vsyncadd [#allocation4], %s15
      %s17 = smul.addr %s13, 128
      %s18 = scalar_lea.hbm %s0, %s17
      %s19 = sshll.u32 [#allocation3], 4
      %s20 = int_to_ptr.vmem [resolvable:$true] %s19
      %25 = dma.hbm_to_vmem [thread:$0]  %s18, 256, %s20, [#allocation4], 128, 128, 8
    $region5: #{tpu_custom_call.1} parent=1 // pred_fallthru
      _
    // Predicated region
    $region6: #{tpu_custom_call.1} parent=1 // pred_check
      _
    $region7: #{tpu_custom_call.1} parent=1 // pred_check_branch
      %27 = sbr.rel (0) target = $region9
    $region8: #{tpu_custom_call.1} parent=1 // pred_region
      %s28 = sadd.s32 0, 0
      %s29 = smul.u32 2, %s28
      %s31 = ssub.s32 256, 256
      %32 = vsyncadd [#allocation7], %s31
      %s33 = smul.addr %s29, 128
      %s34 = scalar_lea.hbm %s1, %s33
      %s35 = sshll.u32 [#allocation6], 4
      %s36 = int_to_ptr.vmem [resolvable:$true] %s35
      %41 = dma.hbm_to_vmem [thread:$0]  %s34, 256, %s36, [#allocation7], 128, 128, 8
    $region9: #{tpu_custom_call.1} parent=1 // pred_fallthru
      _
    // Predicated region
    $region10: #{tpu_custom_call.1} parent=1 // pred_check
      _
    $region11: #{tpu_custom_call.1} parent=1 // pred_check_branch
      %43 = sbr.rel (0) target = $region13
    $region12: #{tpu_custom_call.1} parent=1 // pred_region
      %44 = dma.done [#allocation4], 256
    $region13: #{tpu_custom_call.1} parent=1 // pred_fallthru
      _
    // Predicated region
    $region14: #{tpu_custom_call.1} parent=1 // pred_check
      _
    $region15: #{tpu_custom_call.1} parent=1 // pred_check_branch
      %46 = sbr.rel (0) target = $region17
    $region16: #{tpu_custom_call.1} parent=1 // pred_region
      %47 = dma.done [#allocation7], 256
    $region17: #{tpu_custom_call.1} parent=1 // pred_fallthru
      _
    %s48 = sadd.s32 0, 0
    %s49 = smul.u32 2, %s48
    %s50 = sadd.s32 0, 0
    %s51 = smul.u32 2, %s50
    %p52 = scmp.eq.s32.totalorder 0, 0
    // Predicated region
    $region18: #{tpu_custom_call.1} parent=1 // pred_check
      %p53 = pneg %p52
    $region19: #{tpu_custom_call.1} parent=1 // pred_check_branch
      %55 = sbr.rel (%p53) target = $region21
    $region20: #{tpu_custom_call.1} parent=1 // pred_region
      %56 = vst [vmem:[#allocation2] sm:$0xff] 0.0
    $region21: #{tpu_custom_call.1} parent=1 // pred_fallthru
      _
    %v57 = vld [vmem:[#allocation3] sm:$0xff]
    %v58 = vld [vmem:[#allocation3 + $0x8] sm:$0xff]
    %v59 = vld [vmem:[#allocation6] sm:$0xff]
    %v60 = vld [vmem:[#allocation6 + $0x8] sm:$0xff]
    %v61 = vmul.f32 %v59, 2.0
    %v62 = vmul.f32 %v60, 2.0
    %v63 = vsub.f32 %v61, 1.0
    %v64 = vsub.f32 %v62, 1.0
    %v65 = vmul.f32 %v63, %v57
    %v66 = vmul.f32 %v64, %v58
    %v67 = vand.u32 2147483647, %v65
    %v68 = vand.u32 2147483647, %v66
    %v69 = vsub.f32 0.0, %v67
    %v70 = vsub.f32 0.0, %v68
    %v71 = vmul.f32 %v69, 1.442695
    %v72 = vpow.pop %v71
    %v73 = vmul.f32 %v70, 1.442695
    %v74 = vpow.pop %v73
    %v75 = vsub.f32 0.0, %v65
    %v76 = vsub.f32 0.0, %v66
    %v77 = vmax.f32 %v75, 0.0
    %v78 = vmax.f32 %v76, 0.0
    %v79 = vadd.f32 %v72, 1.0
    %v80 = vlog2.pop %v79
    %v81 = vmul.f32 %v80, 0.6931472
    %v82 = vmul.f32 -0.5, %v72
    %v83 = vadd.f32 %v82, 1.0
    %v84 = vmul.f32 %v83, %v72
    %v85 = vand.u32 2147483647, %v72
    %vm86 = vcmp.lt.f32.partialorder %v85, 0.0004427343
    %v87 = vsel %vm86, %v84, %v81
    %v88 = vadd.f32 %v74, 1.0
    %v89 = vlog2.pop %v88
    %v90 = vmul.f32 %v89, 0.6931472
    %v91 = vmul.f32 -0.5, %v74
    %v92 = vadd.f32 %v91, 1.0
    %v93 = vmul.f32 %v92, %v74
    %v94 = vand.u32 2147483647, %v74
    %vm95 = vcmp.lt.f32.partialorder %v94, 0.0004427343
    %v96 = vsel %vm95, %v93, %v90
    %v97 = vadd.f32 %v77, %v87
    %v98 = vadd.f32 %v78, %v96
    %v99 = vadd.f32 %v72, 1.0
    %v100 = vadd.f32 %v74, 1.0
    %v101 = vrcp.pop %v99
    %v102 = vmul.f32 1.0, %v101
    %v103 = vrcp.pop %v100
    %v104 = vmul.f32 1.0, %v103
    %vm105 = vcmp.ge.f32.partialorder %v65, 0.0
    %vm106 = vcmp.ge.f32.partialorder %v66, 0.0
    %v107 = vsel %vm105, %v72, 1.0
    %v108 = vsel %vm106, %v74, 1.0
    %v109 = vmul.f32 %v107, %v102
    %v110 = vmul.f32 %v108, %v104
    %v111 = vmul.f32 %v109, %v109
    %v112 = vmul.f32 %v110, %v110
    %vm113 = vcmp.eq.f32.partialorder %v59, 1.0
    %vm114 = vcmp.eq.f32.partialorder %v60, 1.0
    %v115 = vsel %vm113, 0.25, 0.0
    %v116 = vsel %vm114, 0.25, 0.0
    %vm117 = vcmp.eq.f32.partialorder %v59, 0.0
    %vm118 = vcmp.eq.f32.partialorder %v60, 0.0
    %v119 = vsel %vm117, 0.75, %v115
    %v120 = vsel %vm118, 0.75, %v116
    %v121 = vmul.f32 %v119, %v111
    %v122 = vmul.f32 %v120, %v112
    %v123 = vmul.f32 %v121, %v97
    %v124 = vmul.f32 %v122, %v98
    %v125 = vld [vmem:[#allocation2] sm:$0xff]
    %v126 = vadd.f32 %v123, %v124
    %v127 = vadd.f32 %v125, %v126
    %128 = vst [vmem:[#allocation2] sm:$0xff] %v127
    // Predicated region
    $region22: #{tpu_custom_call.1} parent=1 // pred_check
      %p129 = pneg %p52
    $region23: #{tpu_custom_call.1} parent=1 // pred_check_branch
      %131 = sbr.rel (%p129) target = $region25
    $region24: #{tpu_custom_call.1} parent=1 // pred_region
      %v132 = vld [vmem:[#allocation2] sm:$0xff]
      %133 = vst [vmem:[#allocation8] sm:$0xff] %v132
    $region25: #{tpu_custom_call.1} parent=1 // pred_fallthru
      _
    // Predicated region
    $region26: #{tpu_custom_call.1} parent=1 // pred_check
      _
    $region27: #{tpu_custom_call.1} parent=1 // pred_check_branch
      %135 = sbr.rel (0) target = $region29
    $region28: #{tpu_custom_call.1} parent=1 // pred_region
      %s137 = ssub.s32 128, 128
      %138 = vsyncadd [#allocation5], %s137
      %s140 = sshll.u32 [#allocation8], 4
      %s141 = int_to_ptr.vmem [resolvable:$true] %s140
      %143 = dma.vmem_to_hbm [thread:$0]  %s141, 128, %s2, [#allocation5]
    $region29: #{tpu_custom_call.1} parent=1 // pred_fallthru
      _
    // Predicated region
    $region30: #{tpu_custom_call.1} parent=1 // pred_check
      _
    $region31: #{tpu_custom_call.1} parent=1 // pred_check_branch
      %145 = sbr.rel (0) target = $region33
    $region32: #{tpu_custom_call.1} parent=1 // pred_region
      %146 = dma.done [#allocation5], 128
    $region33: #{tpu_custom_call.1} parent=1 // pred_fallthru
      _
    %147 = vsyncpa [#allocation4], 1
    %148 = vsyncpa [#allocation7], 1
    %149 = vsyncpa [#allocation5], 1

</llo_original>
